<compile_context>
chip_gen: v7x
topology: tpu7x:2x2x1
jax: 0.10.0
libtpu: 0.0.40
codegen_flags: <defaults>
</compile_context>

<pallas_src>
import functools

import jax
import jax.numpy as jnp
from jax.experimental import pallas as pl
from jax.experimental.pallas import tpu as pltpu


def _round_up(x, m):
    return ((x + m - 1) // m) * m


# ----------------------------------------------------------------------------
# Pallas kernel: grid = (token_tiles, experts); expert axis is the reduction.
# ----------------------------------------------------------------------------
def moe_experts_kernel(
    cnt_ref,    # SMEM int32[E]   routed-token count per expert (scalar prefetch)
    _fch_ref,   # SMEM int32[E]   weight-fetch index (used only by index_maps)
    x_ref,      # (Bt, D_in)      bf16, resident across expert axis
    g_ref,      # (Bt, E)         f32 dense gate matrix, resident across experts
    w1_ref,     # (1, D_in, H)    bf16
    w2_ref,     # (1, H, H)       bf16
    wo_ref,     # (1, H, Dp)      bf16 (lane-padded output projection)
    b_ref,      # (1, 1, 2H+Dp)   f32  [b1 | b2 | bo_pad]
    o_ref,      # (Bt, Dp)        f32 output tile == accumulator
    *, hidden, d_pad,
):
    e = pl.program_id(1)

    @pl.when(e == 0)
    def _init():
        o_ref[...] = jnp.zeros_like(o_ref)

    # Skip experts that received no tokens (gate column is all zeros anyway).
    @pl.when(cnt_ref[e] > 0)
    def _compute():
        H, Dp = hidden, d_pad
        b1 = b_ref[0, :, 0:H]                 # (1, H)
        b2 = b_ref[0, :, H:2 * H]             # (1, H)
        bo = b_ref[0, :, 2 * H:2 * H + Dp]    # (1, Dp)

        x = x_ref[...]                                                    # bf16
        h = jnp.dot(x, w1_ref[0], preferred_element_type=jnp.float32) + b1
        h = jnp.maximum(h, 0.0)                                           # f32
        h = jnp.dot(h.astype(jnp.bfloat16), w2_ref[0],
                    preferred_element_type=jnp.float32) + b2
        h = jnp.maximum(h, 0.0)
        y = jnp.dot(h.astype(jnp.bfloat16), wo_ref[0],
                    preferred_element_type=jnp.float32) + bo              # (Bt, Dp)

        # Select this expert's gate column from the resident (Bt, E) block.
        g = g_ref[...]
        lane = jax.lax.broadcasted_iota(jnp.int32, g.shape, 1)
        ge = jnp.sum(jnp.where(lane == e, g, 0.0), axis=1, keepdims=True)  # (Bt,1)

        o_ref[...] += ge * y


# ----------------------------------------------------------------------------
# Wrapper
# ----------------------------------------------------------------------------
@functools.partial(jax.jit, static_argnames=("top_k",))
def optimized_moe_forward(x, params, *, top_k):
    B, D_in = x.shape
    E, _, H = params["w1"].shape
    D_out = params["wo"].shape[-1]

    # --- gating: tiny matmul + top-k + softmax (plain XLA) -------------------
    logits = jnp.dot(x, params["wg"], preferred_element_type=jnp.float32) \
        + params["bg"][0]
    top_v, top_i = jax.lax.top_k(logits, top_k)              # (B, k)
    gate = jax.nn.softmax(top_v, axis=1)                     # (B, k)
    onehot = jax.nn.one_hot(top_i, E, dtype=jnp.float32)     # (B, k, E)
    gates_dense = jnp.einsum("bk,bke->be", gate, onehot)     # (B, E)

    # per-expert routed counts + weight-fetch schedule (skip = reuse prev block)
    counts = jnp.sum(onehot, axis=(0, 1)).astype(jnp.int32)  # (E,)
    active = counts > 0
    fetch = jax.lax.cummax(
        jnp.where(active, jnp.arange(E, dtype=jnp.int32), 0), axis=0)

    # --- padding / tiling -----------------------------------------------------
    Bt = min(128, _round_up(B, 8))          # token tile (sublanes)
    B_pad = _round_up(B, Bt)
    Dp = _round_up(D_out, 128)              # lane-dense output slab

    x_p = jnp.zeros((B_pad, D_in), jnp.bfloat16).at[:B].set(
        x.astype(jnp.bfloat16))
    g_p = jnp.zeros((B_pad, E), jnp.float32).at[:B].set(gates_dense)

    w1 = params["w1"].astype(jnp.bfloat16)
    w2 = params["w2"].astype(jnp.bfloat16)
    wo = jnp.zeros((E, H, Dp), jnp.bfloat16).at[:, :, :D_out].set(
        params["wo"].astype(jnp.bfloat16))
    bo_pad = jnp.zeros((E, 1, Dp), jnp.float32).at[:, :, :D_out].set(params["bo"])
    bcat = jnp.concatenate([params["b1"], params["b2"], bo_pad], axis=-1)

    T = B_pad // Bt
    kernel = functools.partial(moe_experts_kernel, hidden=H, d_pad=Dp)

    out = pl.pallas_call(
        kernel,
        out_shape=jax.ShapeDtypeStruct((B_pad, Dp), jnp.float32),
        grid_spec=pltpu.PrefetchScalarGridSpec(
            num_scalar_prefetch=2,
            grid=(T, E),
            in_specs=[
                pl.BlockSpec((Bt, D_in), lambda t, e, cnt, fch: (t, 0)),       # x
                pl.BlockSpec((Bt, E), lambda t, e, cnt, fch: (t, 0)),          # gates
                pl.BlockSpec((1, D_in, H), lambda t, e, cnt, fch: (fch[e], 0, 0)),
                pl.BlockSpec((1, H, H), lambda t, e, cnt, fch: (fch[e], 0, 0)),
                pl.BlockSpec((1, H, Dp), lambda t, e, cnt, fch: (fch[e], 0, 0)),
                pl.BlockSpec((1, 1, 2 * H + Dp),
                             lambda t, e, cnt, fch: (fch[e], 0, 0)),           # biases
            ],
            out_specs=pl.BlockSpec((Bt, Dp), lambda t, e, cnt, fch: (t, 0)),
        ),
        compiler_params=pltpu.CompilerParams(
            dimension_semantics=("parallel", "arbitrary"),
        ),
    )(counts, fetch, x_p, g_p, w1, w2, wo, bcat)

    return out[:B, :D_out]


# ----------------------------------------------------------------------------
# Reference (pure JAX, same bf16 matmul inputs / f32 accumulation)
# ----------------------------------------------------------------------------
def moe_reference(x, params, *, top_k):
    B, _ = x.shape
    E = params["w1"].shape[0]
    D_out = params["wo"].shape[-1]
    logits = jnp.dot(x, params["wg"], preferred_element_type=jnp.float32) \
        + params["bg"][0]
    top_v, top_i = jax.lax.top_k(logits, top_k)
    gate = jax.nn.softmax(top_v, axis=1)
    xb = x.astype(jnp.bfloat16)
    out = jnp.zeros((B, D_out), jnp.float32)
    for e in range(E):
        h = jnp.dot(xb, params["w1"][e].astype(jnp.bfloat16),
                    preferred_element_type=jnp.float32) + params["b1"][e, 0]
        h = jnp.maximum(h, 0.0)
        h = jnp.dot(h.astype(jnp.bfloat16), params["w2"][e].astype(jnp.bfloat16),
                    preferred_element_type=jnp.float32) + params["b2"][e, 0]
        h = jnp.maximum(h, 0.0)
        y = jnp.dot(h.astype(jnp.bfloat16), params["wo"][e].astype(jnp.bfloat16),
                    preferred_element_type=jnp.float32) + params["bo"][e, 0]
        w_e = jnp.sum(jnp.where(top_i == e, gate, 0.0), axis=1)  # (B,)
        out = out + w_e[:, None] * y
    return out


# ----------------------------------------------------------------------------
# Deterministic parameter init (PyTorch-Linear-style uniform +-1/sqrt(fan_in))
# ----------------------------------------------------------------------------
def init_params(key, input_dim, output_dim, num_experts, hidden_dim):
    ks = jax.random.split(key, 8)

    def u(k, shape, fan_in):
        bound = 1.0 / jnp.sqrt(fan_in)
        return jax.random.uniform(k, shape, jnp.float32, -bound, bound)

    return {
        "wg": u(ks[0], (input_dim, num_experts), input_dim),
        "bg": u(ks[1], (1, num_experts), input_dim),
        "w1": u(ks[2], (num_experts, input_dim, hidden_dim), input_dim),
        "b1": u(ks[3], (num_experts, 1, hidden_dim), input_dim),
        "w2": u(ks[4], (num_experts, hidden_dim, hidden_dim), hidden_dim),
        "b2": u(ks[5], (num_experts, 1, hidden_dim), hidden_dim),
        "wo": u(ks[6], (num_experts, hidden_dim, output_dim), hidden_dim),
        "bo": u(ks[7], (num_experts, 1, output_dim), hidden_dim),
    }


# ----------------------------------------------------------------------------
if __name__ == "__main__":
    B = 8
    INPUT_DIM = 32
    OUTPUT_DIM = 16
    NUM_EXPERTS = 4
    HIDDEN_DIM = 128
    TOP_K = 2

    key = jax.random.PRNGKey(0)
    kx, kp = jax.random.split(key)
    x = jax.random.normal(kx, (B, INPUT_DIM), jnp.float32)
    params = init_params(kp, INPUT_DIM, OUTPUT_DIM, NUM_EXPERTS, HIDDEN_DIM)

    out = optimized_moe_forward(x, params, top_k=TOP_K)
    out = jax.block_until_ready(out)

    ref = moe_reference(x, params, top_k=TOP_K)
    assert out.shape == (B, OUTPUT_DIM)
    assert jnp.allclose(out, ref, atol=2e-3, rtol=2e-3), (
        f"max abs err {jnp.max(jnp.abs(out - ref))}"
    )

    print("KERNEL_OK")
</pallas_src>

<mosaic_0001>
module attributes {stable_mosaic.version = 11 : i64} {
  func.func @moe_experts_kernel(%arg0: i32, %arg1: i32, %arg2: memref<4xi32, #tpu.memory_space<smem>>, %arg3: memref<4xi32, #tpu.memory_space<smem>>, %arg4: memref<8x32xbf16, #tpu.memory_space<vmem>>, %arg5: memref<8x4xf32, #tpu.memory_space<vmem>>, %arg6: memref<1x32x128xbf16, #tpu.memory_space<vmem>>, %arg7: memref<1x128x128xbf16, #tpu.memory_space<vmem>>, %arg8: memref<1x128x128xbf16, #tpu.memory_space<vmem>>, %arg9: memref<1x1x384xf32, #tpu.memory_space<vmem>>, %arg10: memref<8x128xf32, #tpu.memory_space<vmem>>) attributes {dimension_semantics = [#tpu.dimension_semantics<parallel>, #tpu.dimension_semantics<arbitrary>], iteration_bounds = array<i64: 1, 4>, scalar_prefetch = 2 : i64, scratch_operands = 0 : i64, tpu.core_type = #tpu.core_type<tc>, window_params = [{transform_indices = @transform_0, window_bounds = array<i64: 8, 32>}, {transform_indices = @transform_1, window_bounds = array<i64: 8, 4>}, {transform_indices = @transform_2, window_bounds = array<i64: 1, 32, 128>}, {transform_indices = @transform_3, window_bounds = array<i64: 1, 128, 128>}, {transform_indices = @transform_4, window_bounds = array<i64: 1, 128, 128>}, {transform_indices = @transform_5, window_bounds = array<i64: 1, 1, 384>}, {transform_indices = @transform_6, window_bounds = array<i64: 8, 128>}]} {
    %c0_i32 = arith.constant 0 : i32
    %0 = arith.cmpi eq, %arg1, %c0_i32 : i32
    %1 = arith.extui %0 : i1 to i32
    %c0_i32_0 = arith.constant 0 : i32
    %2 = arith.cmpi ne, %1, %c0_i32_0 : i32
    scf.if %2 {
      %cst = arith.constant 0.000000e+00 : f32
      %8 = vector.broadcast %cst : f32 to vector<8x128xf32>
      %c0 = arith.constant 0 : index
      %c0_3 = arith.constant 0 : index
      %9 = vector.load %arg10[%c0, %c0_3] : memref<8x128xf32, #tpu.memory_space<vmem>>, vector<8x128xf32>
      tpu.vector_store %arg10[%c0, %c0_3], %8 {strides = array<i32>} : memref<8x128xf32, #tpu.memory_space<vmem>>, vector<8x128xf32>,
    } else {
    }
    %3 = arith.index_cast %arg1 : i32 to index
    %4 = memref.load %arg2[%3] : memref<4xi32, #tpu.memory_space<smem>>
    %c0_i32_1 = arith.constant 0 : i32
    %5 = arith.cmpi sgt, %4, %c0_i32_1 : i32
    %6 = arith.extui %5 : i1 to i32
    %c0_i32_2 = arith.constant 0 : i32
    %7 = arith.cmpi ne, %6, %c0_i32_2 : i32
    scf.if %7 {
      %c0 = arith.constant 0 : index
      %c0_3 = arith.constant 0 : index
      %c0_4 = arith.constant 0 : index
      %8 = vector.load %arg9[%c0, %c0_3, %c0_4] : memref<1x1x384xf32, #tpu.memory_space<vmem>>, vector<1x1x128xf32>
      %9 = vector.shape_cast %8 : vector<1x1x128xf32> to vector<1x128xf32>
      %c0_5 = arith.constant 0 : index
      %c0_6 = arith.constant 0 : index
      %c128 = arith.constant 128 : index
      %10 = vector.load %arg9[%c0_5, %c0_6, %c128] : memref<1x1x384xf32, #tpu.memory_space<vmem>>, vector<1x1x128xf32>
      %11 = vector.shape_cast %10 : vector<1x1x128xf32> to vector<1x128xf32>
      %c0_7 = arith.constant 0 : index
      %c0_8 = arith.constant 0 : index
      %c256 = arith.constant 256 : index
      %12 = vector.load %arg9[%c0_7, %c0_8, %c256] : memref<1x1x384xf32, #tpu.memory_space<vmem>>, vector<1x1x128xf32>
      %13 = vector.shape_cast %12 : vector<1x1x128xf32> to vector<1x128xf32>
      %c0_9 = arith.constant 0 : index
      %c0_10 = arith.constant 0 : index
      %14 = vector.load %arg4[%c0_9, %c0_10] : memref<8x32xbf16, #tpu.memory_space<vmem>>, vector<8x32xbf16>
      %c0_11 = arith.constant 0 : index
      %c0_12 = arith.constant 0 : index
      %c0_13 = arith.constant 0 : index
      %15 = vector.load %arg6[%c0_11, %c0_12, %c0_13] : memref<1x32x128xbf16, #tpu.memory_space<vmem>>, vector<1x32x128xbf16>
      %16 = vector.shape_cast %15 : vector<1x32x128xbf16> to vector<32x128xbf16>
      %cst = arith.constant dense<0.000000e+00> : vector<8x128xf32>
      %17 = tpu.matmul %14, %16, %cst {dimension_numbers = #tpu.dot_dimension_numbers<[1], [0], [0], [1], [0, 0, 1, 1], [], []>} : vector<8x32xbf16>, vector<32x128xbf16>, vector<8x128xf32> -> vector<8x128xf32>
      %18 = vector.broadcast %9 : vector<1x128xf32> to vector<8x128xf32>
      %19 = arith.addf %17, %18 : vector<8x128xf32>
      %cst_14 = arith.constant 0.000000e+00 : f32
      %20 = vector.broadcast %cst_14 : f32 to vector<8x128xf32>
      %21 = arith.maximumf %19, %20 : vector<8x128xf32>
      %22 = arith.truncf %21 : vector<8x128xf32> to vector<8x128xbf16>
      %c0_15 = arith.constant 0 : index
      %c0_16 = arith.constant 0 : index
      %c0_17 = arith.constant 0 : index
      %23 = vector.load %arg7[%c0_15, %c0_16, %c0_17] : memref<1x128x128xbf16, #tpu.memory_space<vmem>>, vector<1x128x128xbf16>
      %24 = vector.shape_cast %23 : vector<1x128x128xbf16> to vector<128x128xbf16>
      %cst_18 = arith.constant dense<0.000000e+00> : vector<8x128xf32>
      %25 = tpu.matmul %22, %24, %cst_18 {dimension_numbers = #tpu.dot_dimension_numbers<[1], [0], [0], [1], [0, 0, 1, 1], [], []>} : vector<8x128xbf16>, vector<128x128xbf16>, vector<8x128xf32> -> vector<8x128xf32>
      %26 = vector.broadcast %11 : vector<1x128xf32> to vector<8x128xf32>
      %27 = arith.addf %25, %26 : vector<8x128xf32>
      %cst_19 = arith.constant 0.000000e+00 : f32
      %28 = vector.broadcast %cst_19 : f32 to vector<8x128xf32>
      %29 = arith.maximumf %27, %28 : vector<8x128xf32>
      %30 = arith.truncf %29 : vector<8x128xf32> to vector<8x128xbf16>
      %c0_20 = arith.constant 0 : index
      %c0_21 = arith.constant 0 : index
      %c0_22 = arith.constant 0 : index
      %31 = vector.load %arg8[%c0_20, %c0_21, %c0_22] : memref<1x128x128xbf16, #tpu.memory_space<vmem>>, vector<1x128x128xbf16>
      %32 = vector.shape_cast %31 : vector<1x128x128xbf16> to vector<128x128xbf16>
      %cst_23 = arith.constant dense<0.000000e+00> : vector<8x128xf32>
      %33 = tpu.matmul %30, %32, %cst_23 {dimension_numbers = #tpu.dot_dimension_numbers<[1], [0], [0], [1], [0, 0, 1, 1], [], []>} : vector<8x128xbf16>, vector<128x128xbf16>, vector<8x128xf32> -> vector<8x128xf32>
      %34 = vector.broadcast %13 : vector<1x128xf32> to vector<8x128xf32>
      %35 = arith.addf %33, %34 : vector<8x128xf32>
      %c0_24 = arith.constant 0 : index
      %c0_25 = arith.constant 0 : index
      %36 = vector.load %arg5[%c0_24, %c0_25] : memref<8x4xf32, #tpu.memory_space<vmem>>, vector<8x4xf32>
      %37 = tpu.iota {dimensions = array<i32: 1>} : vector<8x4xi32>
      %38 = vector.broadcast %arg1 : i32 to vector<8x4xi32>
      %39 = arith.cmpi eq, %37, %38 : vector<8x4xi32>
      %cst_26 = arith.constant 0.000000e+00 : f32
      %40 = vector.broadcast %cst_26 : f32 to vector<8x4xf32>
      %41 = arith.select %39, %36, %40 : vector<8x4xi1>, vector<8x4xf32>
      %cst_27 = arith.constant dense<0.000000e+00> : vector<8xf32>
      %42 = vector.multi_reduction <add>, %41, %cst_27 [1] : vector<8x4xf32> to vector<8xf32>
      %43 = vector.shape_cast %42 : vector<8xf32> to vector<8x1xf32>
      %c0_28 = arith.constant 0 : index
      %c0_29 = arith.constant 0 : index
      %44 = vector.load %arg10[%c0_28, %c0_29] : memref<8x128xf32, #tpu.memory_space<vmem>>, vector<8x128xf32>
      %45 = vector.broadcast %43 : vector<8x1xf32> to vector<8x128xf32>
      %46 = arith.mulf %45, %35 : vector<8x128xf32>
      %47 = arith.addf %44, %46 : vector<8x128xf32>
      %c0_30 = arith.constant 0 : index
      %c0_31 = arith.constant 0 : index
      %48 = vector.load %arg10[%c0_30, %c0_31] : memref<8x128xf32, #tpu.memory_space<vmem>>, vector<8x128xf32>
      tpu.vector_store %arg10[%c0_30, %c0_31], %47 {strides = array<i32>} : memref<8x128xf32, #tpu.memory_space<vmem>>, vector<8x128xf32>,
    } else {
    }
    return
  }
  func.func @transform_0(%arg0: i32, %arg1: i32, %arg2: memref<4xi32, #tpu.memory_space<smem>>, %arg3: memref<4xi32, #tpu.memory_space<smem>>) -> (i32, i32) {
    %c0_i32 = arith.constant 0 : i32
    %c0_i32_0 = arith.constant 0 : i32
    return %arg0, %c0_i32 : i32, i32
  }
  func.func @transform_1(%arg0: i32, %arg1: i32, %arg2: memref<4xi32, #tpu.memory_space<smem>>, %arg3: memref<4xi32, #tpu.memory_space<smem>>) -> (i32, i32) {
    %c0_i32 = arith.constant 0 : i32
    %c0_i32_0 = arith.constant 0 : i32
    return %arg0, %c0_i32 : i32, i32
  }
  func.func @transform_2(%arg0: i32, %arg1: i32, %arg2: memref<4xi32, #tpu.memory_space<smem>>, %arg3: memref<4xi32, #tpu.memory_space<smem>>) -> (i32, i32, i32) {
    %0 = arith.index_cast %arg1 : i32 to index
    %1 = memref.load %arg3[%0] : memref<4xi32, #tpu.memory_space<smem>>
    %c0_i32 = arith.constant 0 : i32
    %c0_i32_0 = arith.constant 0 : i32
    %c0_i32_1 = arith.constant 0 : i32
    return %1, %c0_i32, %c0_i32_0 : i32, i32, i32
  }
  func.func @transform_3(%arg0: i32, %arg1: i32, %arg2: memref<4xi32, #tpu.memory_space<smem>>, %arg3: memref<4xi32, #tpu.memory_space<smem>>) -> (i32, i32, i32) {
    %0 = arith.index_cast %arg1 : i32 to index
    %1 = memref.load %arg3[%0] : memref<4xi32, #tpu.memory_space<smem>>
    %c0_i32 = arith.constant 0 : i32
    %c0_i32_0 = arith.constant 0 : i32
    %c0_i32_1 = arith.constant 0 : i32
    return %1, %c0_i32, %c0_i32_0 : i32, i32, i32
  }
  func.func @transform_4(%arg0: i32, %arg1: i32, %arg2: memref<4xi32, #tpu.memory_space<smem>>, %arg3: memref<4xi32, #tpu.memory_space<smem>>) -> (i32, i32, i32) {
    %0 = arith.index_cast %arg1 : i32 to index
    %1 = memref.load %arg3[%0] : memref<4xi32, #tpu.memory_space<smem>>
    %c0_i32 = arith.constant 0 : i32
    %c0_i32_0 = arith.constant 0 : i32
    %c0_i32_1 = arith.constant 0 : i32
    return %1, %c0_i32, %c0_i32_0 : i32, i32, i32
  }
  func.func @transform_5(%arg0: i32, %arg1: i32, %arg2: memref<4xi32, #tpu.memory_space<smem>>, %arg3: memref<4xi32, #tpu.memory_space<smem>>) -> (i32, i32, i32) {
    %0 = arith.index_cast %arg1 : i32 to index
    %1 = memref.load %arg3[%0] : memref<4xi32, #tpu.memory_space<smem>>
    %c0_i32 = arith.constant 0 : i32
    %c0_i32_0 = arith.constant 0 : i32
    %c0_i32_1 = arith.constant 0 : i32
    return %1, %c0_i32, %c0_i32_0 : i32, i32, i32
  }
  func.func @transform_6(%arg0: i32, %arg1: i32, %arg2: memref<4xi32, #tpu.memory_space<smem>>, %arg3: memref<4xi32, #tpu.memory_space<smem>>) -> (i32, i32) {
    %c0_i32 = arith.constant 0 : i32
    %c0_i32_0 = arith.constant 0 : i32
    return %arg0, %c0_i32 : i32, i32
  }
}

</mosaic_0001>

<llo_original>
// kernel: optimized_moe_forward.1
$region0: #{optimized_moe_forward.1}
  #allocation0 [shape = 'u32[]', space=smem, size = 0x4, offset = 0x4, fixed_abs, tag = 'smem constant byte address 0x4 - core index']
  #allocation1 [shape = 'u32[144,128]{1,0:T(1,128)}', space=vmem, size = 0x12000, scoped, tag = 'internal scratch']
  #allocation2 [shape = 's32[1]{0}', space=sflag, size = 0x4, scoped, tag = 'scoped memory for optimized_moe_forward.1']
  #allocation3 [shape = 'u8[512]{0}', space=smem, size = 0x200, scoped, tag = 'prefetched SMEM operand 0']
  #allocation4 [shape = 'u8[512]{0}', space=smem, size = 0x200, scoped, tag = 'prefetched SMEM operand 1']
  %s0 = inlined_call_operand.vmem [shape: s32[4], index: 0, kind: input, shape index: {}]
  %s1 = inlined_call_operand.vmem [shape: s32[4], index: 1, kind: input, shape index: {}]
  %s2 = inlined_call_operand.vmem [shape: bf16[8,32], index: 2, kind: input, shape index: {}]
  %s3 = inlined_call_operand.vmem [shape: f32[8,4], index: 3, kind: input, shape index: {}]
  %s4 = inlined_call_operand.vmem [shape: bf16[4,32,128], index: 4, kind: input, shape index: {}]
  %s5 = inlined_call_operand.vmem [shape: bf16[4,128,128], index: 5, kind: input, shape index: {}]
  %s6 = inlined_call_operand.vmem [shape: bf16[4,128,128], index: 6, kind: input, shape index: {}]
  %s7 = inlined_call_operand.vmem [shape: f32[4,1,384], index: 7, kind: input, shape index: {}]
  %s8 = inlined_call_operand.hbm [shape: f32[8,128], index: 8, kind: output, shape index: {}]
  %s9 = sld [smem:[#allocation0]]
  $region65: #{optimized_moe_forward.1} parent=0
    _
  %s11 = ssub.s32 1, %s9
  %s12 = scalar_select 0, %s11, %s9
  %s13 = sshll.u32 %s0, 4
  %s14 = int_to_ptr.vmem [resolvable:$true] %s13
  %16 = dma.vmem_to_smem %s14, 16, [#allocation3], [#allocation2]
  %s17 = sshll.u32 %s1, 4
  %s18 = int_to_ptr.vmem [resolvable:$true] %s17
  %20 = dma.vmem_to_smem %s18, 16, [#allocation4], [#allocation2]
  %21 = dma.done [#allocation2], 32
  %22 = sfence
  $region1: #{optimized_moe_forward.1} parent=0
    #allocation5 [shape = 'u8[4096]{0}', space=vmem, size = 0x1000, scoped, tag = 'output window, operand 0, single buffered']
    #allocation6 [shape = 's32[2]{0}', space=sflag, size = 0x8, scoped, tag = 'scoped memory for optimized_moe_forward.1']
    %23 = vsyncpa [#allocation6], 0
    loop: start=0, step=1, limit=6
    $region2: #{optimized_moe_forward.1} parent=1 // loop_pre_header
      _
    $region3: #{optimized_moe_forward.1} parent=1 // loop_header
      %s25 = sphi 0, %s29
      %p26 = scmp.ge.s32.totalorder %s25, 6
      %s32 = sphi 0, %s44
      %s33 = sphi 0, %s40
      %s34 = sphi 0, %s32
      %s35 = sphi 0, %s33
      %s36 = sphi 0, %s34
      %s37 = sphi 0, %s35
      %s47 = sphi 0, %s49
      %s50 = sphi 0, %s47
      %s51 = sphi 0, %s50
      %s67 = sphi 0, %s51
      %s73 = sphi 0, %s75
      %s76 = sphi 0, %s73
      %s77 = sphi 0, %s76
      %s93 = sphi 0, %s77
      %s101 = sphi 0, %s103
      %s104 = sphi 0, %s101
      %s105 = sphi 0, %s104
      %s121 = sphi 0, %s105
      %s129 = sphi 0, %s131
      %s132 = sphi 0, %s129
      %s133 = sphi 0, %s132
      %s149 = sphi 0, %s133
      %s157 = sphi 0, %s159
      %s160 = sphi 0, %s157
      %s161 = sphi 0, %s160
      %s177 = sphi 0, %s161
      %s185 = sphi 0, %s187
      %s188 = sphi 0, %s185
      %s189 = sphi 0, %s188
      %s205 = sphi 0, %s189
      %s211 = sphi 0, %s213
      %s214 = sphi 0, %s211
      %s215 = sphi 0, %s214
      %s231 = sphi 0, %s215
    $region4: #{optimized_moe_forward.1} parent=1 // loop_header_branch
      %28 = sbr.rel (%p26) target = $region8
    $region5: #{optimized_moe_forward.1} parent=1 // loop_body
      %s30 = ssub.s32 %s25, 1
      %s31 = ssub.s32 %s25, 2
      %s38 = sadd.s32 1, %s33
      %p39 = scmp.ge.s32.totalorder %s38, 4
      %s40 = scalar_select %p39, 0, %s38
      %s41 = sadd.s32 1, %s32
      %s42 = scalar_select %p39, %s41, %s32
      %p43 = scmp.ge.s32.totalorder %s42, 1
      %s44 = scalar_select %p43, 0, %s42
      %s45 = ssub.s32 %s32, %s44
      %p46 = scmp.eq.s32.totalorder %s45, 0
      %s48 = sadd.s32 %s47, 1
      %s49 = scalar_select %p46, %s47, %s48
      %p52 = pneg %p46
      %p53 = scmp.eq.s32.totalorder %s25, 3
      %p54 = por %p52, %p53
      %p55 = scmp.ne.s32.totalorder %s47, %s50
      %p56 = scmp.eq.s32.totalorder %s25, 0
      %p57 = por %p55, %p56
      %p58 = scmp.ne.s32.totalorder %s47, %s50
      %p59 = scmp.eq.s32.totalorder %s30, 3
      %p60 = por %p58, %p59
      %p61 = scmp.ne.s32.totalorder %s50, %s51
      %p62 = scmp.eq.s32.totalorder %s30, 0
      %p63 = por %p61, %p62
      %p64 = scmp.ne.s32.totalorder %s50, %s51
      %p65 = scmp.eq.s32.totalorder %s31, 3
      %p66 = por %p64, %p65
      %p68 = scmp.ne.s32.totalorder %s51, %s67
      %p69 = scmp.eq.s32.totalorder %s31, 0
      %p70 = por %p68, %p69
      %s71 = ssub.s32 %s32, %s44
      %p72 = scmp.eq.s32.totalorder %s71, 0
      %s74 = sadd.s32 %s73, 1
      %s75 = scalar_select %p72, %s73, %s74
      %p78 = pneg %p72
      %p79 = scmp.eq.s32.totalorder %s25, 3
      %p80 = por %p78, %p79
      %p81 = scmp.ne.s32.totalorder %s73, %s76
      %p82 = scmp.eq.s32.totalorder %s25, 0
      %p83 = por %p81, %p82
      %p84 = scmp.ne.s32.totalorder %s73, %s76
      %p85 = scmp.eq.s32.totalorder %s30, 3
      %p86 = por %p84, %p85
      %p87 = scmp.ne.s32.totalorder %s76, %s77
      %p88 = scmp.eq.s32.totalorder %s30, 0
      %p89 = por %p87, %p88
      %p90 = scmp.ne.s32.totalorder %s76, %s77
      %p91 = scmp.eq.s32.totalorder %s31, 3
      %p92 = por %p90, %p91
      %p94 = scmp.ne.s32.totalorder %s77, %s93
      %p95 = scmp.eq.s32.totalorder %s31, 0
      %p96 = por %p94, %p95
      %s97 = sld [smem:[#allocation4 + %s33]]
      %s98 = sld [smem:[#allocation4 + %s40]]
      %s99 = ssub.s32 %s97, %s98
      %p100 = scmp.eq.s32.totalorder %s99, 0
      %s102 = sadd.s32 %s101, 1
      %s103 = scalar_select %p100, %s101, %s102
      %p106 = pneg %p100
      %p107 = scmp.eq.s32.totalorder %s25, 3
      %p108 = por %p106, %p107
      %p109 = scmp.ne.s32.totalorder %s101, %s104
      %p110 = scmp.eq.s32.totalorder %s25, 0
      %p111 = por %p109, %p110
      %p112 = scmp.ne.s32.totalorder %s101, %s104
      %p113 = scmp.eq.s32.totalorder %s30, 3
      %p114 = por %p112, %p113
      %p115 = scmp.ne.s32.totalorder %s104, %s105
      %p116 = scmp.eq.s32.totalorder %s30, 0
      %p117 = por %p115, %p116
      %p118 = scmp.ne.s32.totalorder %s104, %s105
      %p119 = scmp.eq.s32.totalorder %s31, 3
      %p120 = por %p118, %p119
      %p122 = scmp.ne.s32.totalorder %s105, %s121
      %p123 = scmp.eq.s32.totalorder %s31, 0
      %p124 = por %p122, %p123
      %s125 = sld [smem:[#allocation4 + %s33]]
      %s126 = sld [smem:[#allocation4 + %s40]]
      %s127 = ssub.s32 %s125, %s126
      %p128 = scmp.eq.s32.totalorder %s127, 0
      %s130 = sadd.s32 %s129, 1
      %s131 = scalar_select %p128, %s129, %s130
      %p134 = pneg %p128
      %p135 = scmp.eq.s32.totalorder %s25, 3
      %p136 = por %p134, %p135
      %p137 = scmp.ne.s32.totalorder %s129, %s132
      %p138 = scmp.eq.s32.totalorder %s25, 0
      %p139 = por %p137, %p138
      %p140 = scmp.ne.s32.totalorder %s129, %s132
      %p141 = scmp.eq.s32.totalorder %s30, 3
      %p142 = por %p140, %p141
      %p143 = scmp.ne.s32.totalorder %s132, %s133
      %p144 = scmp.eq.s32.totalorder %s30, 0
      %p145 = por %p143, %p144
      %p146 = scmp.ne.s32.totalorder %s132, %s133
      %p147 = scmp.eq.s32.totalorder %s31, 3
      %p148 = por %p146, %p147
      %p150 = scmp.ne.s32.totalorder %s133, %s149
      %p151 = scmp.eq.s32.totalorder %s31, 0
      %p152 = por %p150, %p151
      %s153 = sld [smem:[#allocation4 + %s33]]
      %s154 = sld [smem:[#allocation4 + %s40]]
      %s155 = ssub.s32 %s153, %s154
      %p156 = scmp.eq.s32.totalorder %s155, 0
      %s158 = sadd.s32 %s157, 1
      %s159 = scalar_select %p156, %s157, %s158
      %p162 = pneg %p156
      %p163 = scmp.eq.s32.totalorder %s25, 3
      %p164 = por %p162, %p163
      %p165 = scmp.ne.s32.totalorder %s157, %s160
      %p166 = scmp.eq.s32.totalorder %s25, 0
      %p167 = por %p165, %p166
      %p168 = scmp.ne.s32.totalorder %s157, %s160
      %p169 = scmp.eq.s32.totalorder %s30, 3
      %p170 = por %p168, %p169
      %p171 = scmp.ne.s32.totalorder %s160, %s161
      %p172 = scmp.eq.s32.totalorder %s30, 0
      %p173 = por %p171, %p172
      %p174 = scmp.ne.s32.totalorder %s160, %s161
      %p175 = scmp.eq.s32.totalorder %s31, 3
      %p176 = por %p174, %p175
      %p178 = scmp.ne.s32.totalorder %s161, %s177
      %p179 = scmp.eq.s32.totalorder %s31, 0
      %p180 = por %p178, %p179
      %s181 = sld [smem:[#allocation4 + %s33]]
      %s182 = sld [smem:[#allocation4 + %s40]]
      %s183 = ssub.s32 %s181, %s182
      %p184 = scmp.eq.s32.totalorder %s183, 0
      %s186 = sadd.s32 %s185, 1
      %s187 = scalar_select %p184, %s185, %s186
      %p190 = pneg %p184
      %p191 = scmp.eq.s32.totalorder %s25, 3
      %p192 = por %p190, %p191
      %p193 = scmp.ne.s32.totalorder %s185, %s188
      %p194 = scmp.eq.s32.totalorder %s25, 0
      %p195 = por %p193, %p194
      %p196 = scmp.ne.s32.totalorder %s185, %s188
      %p197 = scmp.eq.s32.totalorder %s30, 3
      %p198 = por %p196, %p197
      %p199 = scmp.ne.s32.totalorder %s188, %s189
      %p200 = scmp.eq.s32.totalorder %s30, 0
      %p201 = por %p199, %p200
      %p202 = scmp.ne.s32.totalorder %s188, %s189
      %p203 = scmp.eq.s32.totalorder %s31, 3
      %p204 = por %p202, %p203
      %p206 = scmp.ne.s32.totalorder %s189, %s205
      %p207 = scmp.eq.s32.totalorder %s31, 0
      %p208 = por %p206, %p207
      %s209 = ssub.s32 %s32, %s44
      %p210 = scmp.eq.s32.totalorder %s209, 0
      %s212 = sadd.s32 %s211, 1
      %s213 = scalar_select %p210, %s211, %s212
      %p216 = pneg %p210
      %p217 = scmp.eq.s32.totalorder %s25, 3
      %p218 = por %p216, %p217
      %p219 = scmp.ne.s32.totalorder %s211, %s214
      %p220 = scmp.eq.s32.totalorder %s25, 0
      %p221 = por %p219, %p220
      %p222 = scmp.ne.s32.totalorder %s211, %s214
      %p223 = scmp.eq.s32.totalorder %s30, 3
      %p224 = por %p222, %p223
      %p225 = scmp.ne.s32.totalorder %s214, %s215
      %p226 = scmp.eq.s32.totalorder %s30, 0
      %p227 = por %p225, %p226
      %p228 = scmp.ne.s32.totalorder %s214, %s215
      %p229 = scmp.eq.s32.totalorder %s31, 3
      %p230 = por %p228, %p229
      %p232 = scmp.ne.s32.totalorder %s215, %s231
      %p233 = scmp.eq.s32.totalorder %s31, 0
      %p234 = por %p232, %p233
      %p235 = scmp.le.s32.totalorder 1, %s25
      %p236 = scmp.lt.s32.totalorder %s25, 5
      %p237 = pnand %p235, %p236
      %p238 = pneg %p237
      // Predicated region
      $region9: #{optimized_moe_forward.1} parent=5 // pred_check
        _
      $region10: #{optimized_moe_forward.1} parent=5 // pred_check_branch
        %240 = sbr.rel (%p237) target = $region12
      $region11: #{optimized_moe_forward.1} parent=5 // pred_region
        %s241 = ssub.s32 %s25, 1
        // Predicated region
        $region13: #{optimized_moe_forward.1} parent=11 // pred_check
          %p242 = pneg %p63
        $region14: #{optimized_moe_forward.1} parent=11 // pred_check_branch
          %244 = sbr.rel (%p242) target = $region16
        $region15: #{optimized_moe_forward.1} parent=11 // pred_region
          %p245 = scmp.lt.s32.totalorder %s34, 0
          %s246 = scalar_select %p245, %s34, 0
          %s247 = smul.addr %s246, 4
          %s248 = scalar_lea.vmem %s2, %s247
        $region16: #{optimized_moe_forward.1} parent=11 // pred_fallthru
          _
        // Predicated region
        $region17: #{optimized_moe_forward.1} parent=11 // pred_check
          %p249 = pneg %p89
        $region18: #{optimized_moe_forward.1} parent=11 // pred_check_branch
          %251 = sbr.rel (%p249) target = $region20
        $region19: #{optimized_moe_forward.1} parent=11 // pred_region
          %p252 = scmp.lt.s32.totalorder %s34, 0
          %s253 = scalar_select %p252, %s34, 0
          %s254 = smul.addr %s253, 8
          %s255 = scalar_lea.vmem %s3, %s254
        $region20: #{optimized_moe_forward.1} parent=11 // pred_fallthru
          _
      $region12: #{optimized_moe_forward.1} parent=5 // pred_fallthru
        _
      %p256 = scmp.lt.s32.totalorder %s25, 4
      // Predicated region
      $region21: #{optimized_moe_forward.1} parent=5 // pred_check
        %p257 = pneg %p256
      $region22: #{optimized_moe_forward.1} parent=5 // pred_check_branch
        %259 = sbr.rel (%p257) target = $region24
      $region23: #{optimized_moe_forward.1} parent=5 // pred_region
        // Predicated region
        $region25: #{optimized_moe_forward.1} parent=23 // pred_check
          %p260 = pneg %p111
        $region26: #{optimized_moe_forward.1} parent=23 // pred_check_branch
          %262 = sbr.rel (%p260) target = $region28
        $region27: #{optimized_moe_forward.1} parent=23 // pred_region
          %s263 = sld [smem:[#allocation4 + %s33]]
          %p264 = scmp.lt.s32.totalorder %s263, 3
          %s265 = scalar_select %p264, %s263, 3
          %s266 = smul.addr %s265, 4
          %s267 = smul.addr %s266, 4
          %s268 = scalar_lea.vmem %s4, %s267
          %s269 = sld [smem:[#allocation4 + %s33]]
        $region28: #{optimized_moe_forward.1} parent=23 // pred_fallthru
          _
        // Predicated region
        $region29: #{optimized_moe_forward.1} parent=23 // pred_check
          %p270 = pneg %p139
        $region30: #{optimized_moe_forward.1} parent=23 // pred_check_branch
          %272 = sbr.rel (%p270) target = $region32
        $region31: #{optimized_moe_forward.1} parent=23 // pred_region
          %s273 = sld [smem:[#allocation4 + %s33]]
          %p274 = scmp.lt.s32.totalorder %s273, 3
          %s275 = scalar_select %p274, %s273, 3
          %s276 = smul.addr %s275, 16
          %s277 = smul.addr %s276, 4
          %s278 = scalar_lea.vmem %s5, %s277
          %s279 = sld [smem:[#allocation4 + %s33]]
        $region32: #{optimized_moe_forward.1} parent=23 // pred_fallthru
          _
        // Predicated region
        $region33: #{optimized_moe_forward.1} parent=23 // pred_check
          %p280 = pneg %p167
        $region34: #{optimized_moe_forward.1} parent=23 // pred_check_branch
          %282 = sbr.rel (%p280) target = $region36
        $region35: #{optimized_moe_forward.1} parent=23 // pred_region
          %s283 = sld [smem:[#allocation4 + %s33]]
          %p284 = scmp.lt.s32.totalorder %s283, 3
          %s285 = scalar_select %p284, %s283, 3
          %s286 = smul.addr %s285, 16
          %s287 = smul.addr %s286, 4
          %s288 = scalar_lea.vmem %s6, %s287
          %s289 = sld [smem:[#allocation4 + %s33]]
        $region36: #{optimized_moe_forward.1} parent=23 // pred_fallthru
          _
        // Predicated region
        $region37: #{optimized_moe_forward.1} parent=23 // pred_check
          %p290 = pneg %p195
        $region38: #{optimized_moe_forward.1} parent=23 // pred_check_branch
          %292 = sbr.rel (%p290) target = $region40
        $region39: #{optimized_moe_forward.1} parent=23 // pred_region
          %s293 = sld [smem:[#allocation4 + %s33]]
          %p294 = scmp.lt.s32.totalorder %s293, 3
          %s295 = scalar_select %p294, %s293, 3
          %s296 = smul.addr %s295, 3
          %s297 = scalar_lea.vmem %s7, %s296
          %s298 = sld [smem:[#allocation4 + %s33]]
        $region40: #{optimized_moe_forward.1} parent=23 // pred_fallthru
          _
      $region24: #{optimized_moe_forward.1} parent=5 // pred_fallthru
        _
      %p299 = scmp.le.s32.totalorder 1, %s25
      %p300 = scmp.lt.s32.totalorder %s25, 5
      %p301 = pnand %p299, %p300
      %p302 = pneg %p301
      // Predicated region
      $region41: #{optimized_moe_forward.1} parent=5 // pred_check
        _
      $region42: #{optimized_moe_forward.1} parent=5 // pred_check_branch
        %304 = sbr.rel (%p301) target = $region44
      $region43: #{optimized_moe_forward.1} parent=5 // pred_region
        %s305 = ssub.s32 %s25, 1
        %p306 = scmp.lt.s32.totalorder %s34, 0
        %s307 = scalar_select %p306, %s34, 0
        %s308 = smul.addr %s307, 4
        %s309 = scalar_lea.vmem %s2, %s308
        %p310 = pneg %p63
        %p311 = pneg %p60
        %p312 = scmp.lt.s32.totalorder %s34, 0
        %s313 = scalar_select %p312, %s34, 0
        %s314 = smul.addr %s313, 8
        %s315 = scalar_lea.vmem %s3, %s314
        %p316 = pneg %p89
        %p317 = pneg %p86
        %s318 = sld [smem:[#allocation4 + %s35]]
        %p319 = scmp.lt.s32.totalorder %s318, 3
        %s320 = scalar_select %p319, %s318, 3
        %s321 = smul.addr %s320, 4
        %s322 = smul.addr %s321, 4
        %s323 = scalar_lea.vmem %s4, %s322
        %p324 = pneg %p117
        %p325 = pneg %p114
        %s326 = sld [smem:[#allocation4 + %s35]]
        %p327 = scmp.lt.s32.totalorder %s326, 3
        %s328 = scalar_select %p327, %s326, 3
        %s329 = smul.addr %s328, 16
        %s330 = smul.addr %s329, 4
        %s331 = scalar_lea.vmem %s5, %s330
        %p332 = pneg %p145
        %p333 = pneg %p142
        %s334 = sld [smem:[#allocation4 + %s35]]
        %p335 = scmp.lt.s32.totalorder %s334, 3
        %s336 = scalar_select %p335, %s334, 3
        %s337 = smul.addr %s336, 16
        %s338 = smul.addr %s337, 4
        %s339 = scalar_lea.vmem %s6, %s338
        %p340 = pneg %p173
        %p341 = pneg %p170
        %s342 = sld [smem:[#allocation4 + %s35]]
        %p343 = scmp.lt.s32.totalorder %s342, 3
        %s344 = scalar_select %p343, %s342, 3
        %s345 = smul.addr %s344, 3
        %s346 = scalar_lea.vmem %s7, %s345
        %p347 = pneg %p201
        %p348 = pneg %p198
        %p349 = pneg %p227
        %p350 = pneg %p224
        %p351 = scmp.lt.s32.totalorder %s34, 0
        %s352 = scalar_select %p351, %s34, 0
        %s353 = smul.addr %s352, 4
        %s354 = scalar_lea.vmem %s2, %s353
        %p355 = scmp.lt.s32.totalorder %s34, 0
        %s356 = scalar_select %p355, %s34, 0
        %s357 = smul.addr %s356, 8
        %s358 = scalar_lea.vmem %s3, %s357
        %s359 = sld [smem:[#allocation4 + %s35]]
        %p360 = scmp.lt.s32.totalorder %s359, 3
        %s361 = scalar_select %p360, %s359, 3
        %s362 = smul.addr %s361, 4
        %s363 = smul.addr %s362, 4
        %s364 = scalar_lea.vmem %s4, %s363
        %s365 = sld [smem:[#allocation4 + %s35]]
        %s366 = sld [smem:[#allocation4 + %s35]]
        %p367 = scmp.lt.s32.totalorder %s366, 3
        %s368 = scalar_select %p367, %s366, 3
        %s369 = smul.addr %s368, 16
        %s370 = smul.addr %s369, 4
        %s371 = scalar_lea.vmem %s5, %s370
        %s372 = sld [smem:[#allocation4 + %s35]]
        %s373 = sld [smem:[#allocation4 + %s35]]
        %p374 = scmp.lt.s32.totalorder %s373, 3
        %s375 = scalar_select %p374, %s373, 3
        %s376 = smul.addr %s375, 16
        %s377 = smul.addr %s376, 4
        %s378 = scalar_lea.vmem %s6, %s377
        %s379 = sld [smem:[#allocation4 + %s35]]
        %s380 = sld [smem:[#allocation4 + %s35]]
        %p381 = scmp.lt.s32.totalorder %s380, 3
        %s382 = scalar_select %p381, %s380, 3
        %s383 = smul.addr %s382, 3
        %s384 = scalar_lea.vmem %s7, %s383
        %s385 = sld [smem:[#allocation4 + %s35]]
        %p387 = scmp.eq.s32.totalorder %s35, 0
        // Predicated region
        $region45: #{optimized_moe_forward.1} parent=43 // pred_check
          %p388 = pneg %p387
        $region46: #{optimized_moe_forward.1} parent=43 // pred_check_branch
          %390 = sbr.rel (%p388) target = $region48
        $region47: #{optimized_moe_forward.1} parent=43 // pred_region
          %391 = vst [vmem:[#allocation5] sm:$0xff] 0.0
        $region48: #{optimized_moe_forward.1} parent=43 // pred_fallthru
          _
        %s392 = sld [smem:[#allocation3 + %s35]]
        %p393 = scmp.gt.s32.totalorder %s392, 0
        // Predicated region
        $region49: #{optimized_moe_forward.1} parent=43 // pred_check
          %p394 = pneg %p393
        $region50: #{optimized_moe_forward.1} parent=43 // pred_check_branch
          %396 = sbr.rel (%p394) target = $region52
        $region51: #{optimized_moe_forward.1} parent=43 // pred_region
          %v397 = vld [vmem:[%s384] sm:$0x1]
          %v398 = vld [vmem:[%s384 + $0x1] sm:$0x1]
          %v399 = vld [vmem:[%s384 + $0x2] sm:$0x1]
          %v400 = vld [vmem:[%s354] sm:$0xf]
          %v401 = vld [vmem:[%s364] sm:$0xf]
          %v402 = vld [vmem:[%s364 + $0x4] sm:$0xf]
          %v403 = vld [vmem:[%s364 + $0x8] sm:$0xf]
          %v404 = vld [vmem:[%s364 + $0xc] sm:$0xf]
          %v406 = vlaneseq
          %v407 = vshrl.u32 %v406, 7
          %v408 = vsub.s32 0, %v407
          %v409 = vrot.slane %v397, %v408
          %v415 = vunpack.c.l.b16 %v401
          %v416 = vunpack.c.l.b16 %v402
          %v417 = vunpack.c.l.b16 %v403
          %v418 = vunpack.c.l.b16 %v404
          %v419 = vpack.c.b16 %v416, %v415
          %v420 = vpack.c.b16 %v418, %v417
          %vm423 = vcmask 261120
          %v425 = vsel %vm423, %v400, 0
          %427 = vmatprep.subr.bf16.mxu0 0
          %428 = vmatpush1.bf16.msra.mxu0 %v419
          %429 = vmatprep.subr.bf16.mxu0 0
          %430 = vmatpush1.bf16.msra.mxu0 %v420
          %431 = vmatprep.subr.bf16.mxu0 0
          %432 = vmatpush1.bf16.msra.mxu0 0
          %433 = vmatprep.subr.bf16.mxu0 0
          %434 = vmatpush1.bf16.msra.mxu0 0
          %435 = vmatprep.subr.bf16.mxu0 0
          %436 = vmatpush1.bf16.msra.mxu0 0
          %437 = vmatprep.subr.bf16.mxu0 0
          %438 = vmatpush1.bf16.msra.mxu0 0
          %439 = vmatprep.subr.bf16.mxu0 0
          %440 = vmatpush1.bf16.msra.mxu0 0
          %441 = vmatprep.subr.bf16.mxu0 0
          %442 = vmatpush1.bf16.msra.mxu0 0
          %443 = vmatprep.subr.bf16.mxu0 0
          %444 = vmatpush1.bf16.msra.mxu0 0
          %445 = vmatprep.subr.bf16.mxu0 0
          %446 = vmatpush1.bf16.msra.mxu0 0
          %447 = vmatprep.subr.bf16.mxu0 0
          %448 = vmatpush1.bf16.msra.mxu0 0
          %449 = vmatprep.subr.bf16.mxu0 0
          %450 = vmatpush1.bf16.msra.mxu0 0
          %451 = vmatprep.subr.bf16.mxu0 0
          %452 = vmatpush1.bf16.msra.mxu0 0
          %453 = vmatprep.subr.bf16.mxu0 0
          %454 = vmatpush1.bf16.msra.mxu0 0
          %455 = vmatprep.subr.bf16.mxu0 0
          %456 = vmatpush1.bf16.msra.mxu0 0
          %457 = vmatprep.subr.bf16.mxu0 0
          %458 = vmatpush1.bf16.msra.mxu0 0
          %459 = vmatprep.mubr.bf16.mxu0 0
          %460 = vmatmul.mubr.bf16.gmra.mrb[0].mxu0 %v425
          %v461 = vpop.f32.mrb[0].mxu0
          %v462 = vadd.f32 %v409, %v461
          %v463 = vpop.f32.mrb[0].mxu0
          %v464 = vpop.f32.mrb[0].mxu0
          %v465 = vpop.f32.mrb[0].mxu0
          %466 = vdwg.mxu0
          %v467 = vmax.f32 %v462, 0.0
          %v468 = vpack.c.bf16 %v467, %v467
          %v469 = vld [vmem:[%s371] sm:$0xf]
          %v470 = vld [vmem:[%s371 + $0x4] sm:$0xf]
          %v471 = vld [vmem:[%s371 + $0x8] sm:$0xf]
          %v472 = vld [vmem:[%s371 + $0xc] sm:$0xf]
          %v473 = vld [vmem:[%s371 + $0x10] sm:$0xf]
          %v474 = vld [vmem:[%s371 + $0x14] sm:$0xf]
          %v475 = vld [vmem:[%s371 + $0x18] sm:$0xf]
          %v476 = vld [vmem:[%s371 + $0x1c] sm:$0xf]
          %v477 = vld [vmem:[%s371 + $0x20] sm:$0xf]
          %v478 = vld [vmem:[%s371 + $0x24] sm:$0xf]
          %v479 = vld [vmem:[%s371 + $0x28] sm:$0xf]
          %v480 = vld [vmem:[%s371 + $0x2c] sm:$0xf]
          %v481 = vld [vmem:[%s371 + $0x30] sm:$0xf]
          %v482 = vld [vmem:[%s371 + $0x34] sm:$0xf]
          %v483 = vld [vmem:[%s371 + $0x38] sm:$0xf]
          %v484 = vld [vmem:[%s371 + $0x3c] sm:$0xf]
          %v486 = vlaneseq
          %v487 = vshrl.u32 %v486, 7
          %v488 = vsub.s32 0, %v487
          %v489 = vrot.slane %v398, %v488
          %v507 = vunpack.c.l.b16 %v469
          %v508 = vunpack.c.l.b16 %v470
          %v509 = vunpack.c.l.b16 %v471
          %v510 = vunpack.c.l.b16 %v472
          %v511 = vunpack.c.l.b16 %v473
          %v512 = vunpack.c.l.b16 %v474
          %v513 = vunpack.c.l.b16 %v475
          %v514 = vunpack.c.l.b16 %v476
          %v515 = vunpack.c.l.b16 %v477
          %v516 = vunpack.c.l.b16 %v478
          %v517 = vunpack.c.l.b16 %v479
          %v518 = vunpack.c.l.b16 %v480
          %v519 = vunpack.c.l.b16 %v481
          %v520 = vunpack.c.l.b16 %v482
          %v521 = vunpack.c.l.b16 %v483
          %v522 = vunpack.c.l.b16 %v484
          %v523 = vpack.c.b16 %v508, %v507
          %v524 = vpack.c.b16 %v510, %v509
          %v525 = vpack.c.b16 %v512, %v511
          %v526 = vpack.c.b16 %v514, %v513
          %v527 = vpack.c.b16 %v516, %v515
          %v528 = vpack.c.b16 %v518, %v517
          %v529 = vpack.c.b16 %v520, %v519
          %v530 = vpack.c.b16 %v522, %v521
          %539 = vmatprep.subr.bf16.mxu0 0
          %540 = vmatpush1.bf16.msra.mxu0 %v523
          %541 = vmatprep.subr.bf16.mxu0 0
          %542 = vmatpush1.bf16.msra.mxu0 %v524
          %543 = vmatprep.subr.bf16.mxu0 0
          %544 = vmatpush1.bf16.msra.mxu0 %v525
          %545 = vmatprep.subr.bf16.mxu0 0
          %546 = vmatpush1.bf16.msra.mxu0 %v526
          %547 = vmatprep.subr.bf16.mxu0 0
          %548 = vmatpush1.bf16.msra.mxu0 %v527
          %549 = vmatprep.subr.bf16.mxu0 0
          %550 = vmatpush1.bf16.msra.mxu0 %v528
          %551 = vmatprep.subr.bf16.mxu0 0
          %552 = vmatpush1.bf16.msra.mxu0 %v529
          %553 = vmatprep.subr.bf16.mxu0 0
          %554 = vmatpush1.bf16.msra.mxu0 %v530
          %555 = vmatprep.subr.bf16.mxu0 0
          %556 = vmatpush1.bf16.msra.mxu0 0
          %557 = vmatprep.subr.bf16.mxu0 0
          %558 = vmatpush1.bf16.msra.mxu0 0
          %559 = vmatprep.subr.bf16.mxu0 0
          %560 = vmatpush1.bf16.msra.mxu0 0
          %561 = vmatprep.subr.bf16.mxu0 0
          %562 = vmatpush1.bf16.msra.mxu0 0
          %563 = vmatprep.subr.bf16.mxu0 0
          %564 = vmatpush1.bf16.msra.mxu0 0
          %565 = vmatprep.subr.bf16.mxu0 0
          %566 = vmatpush1.bf16.msra.mxu0 0
          %567 = vmatprep.subr.bf16.mxu0 0
          %568 = vmatpush1.bf16.msra.mxu0 0
          %569 = vmatprep.subr.bf16.mxu0 0
          %570 = vmatpush1.bf16.msra.mxu0 0
          %571 = vmatprep.mubr.bf16.mxu0 0
          %572 = vmatmul.mubr.bf16.gmra.mrb[0].mxu0 %v468
          %v573 = vpop.f32.mrb[0].mxu0
          %v574 = vadd.f32 %v489, %v573
          %v575 = vpop.f32.mrb[0].mxu0
          %v576 = vpop.f32.mrb[0].mxu0
          %v577 = vpop.f32.mrb[0].mxu0
          %578 = vdwg.mxu0
          %v579 = vmax.f32 %v574, 0.0
          %v580 = vpack.c.bf16 %v579, %v579
          %v581 = vld [vmem:[%s378] sm:$0xf]
          %v582 = vld [vmem:[%s378 + $0x4] sm:$0xf]
          %v583 = vld [vmem:[%s378 + $0x8] sm:$0xf]
          %v584 = vld [vmem:[%s378 + $0xc] sm:$0xf]
          %v585 = vld [vmem:[%s378 + $0x10] sm:$0xf]
          %v586 = vld [vmem:[%s378 + $0x14] sm:$0xf]
          %v587 = vld [vmem:[%s378 + $0x18] sm:$0xf]
          %v588 = vld [vmem:[%s378 + $0x1c] sm:$0xf]
          %v589 = vld [vmem:[%s378 + $0x20] sm:$0xf]
          %v590 = vld [vmem:[%s378 + $0x24] sm:$0xf]
          %v591 = vld [vmem:[%s378 + $0x28] sm:$0xf]
          %v592 = vld [vmem:[%s378 + $0x2c] sm:$0xf]
          %v593 = vld [vmem:[%s378 + $0x30] sm:$0xf]
          %v594 = vld [vmem:[%s378 + $0x34] sm:$0xf]
          %v595 = vld [vmem:[%s378 + $0x38] sm:$0xf]
          %v596 = vld [vmem:[%s378 + $0x3c] sm:$0xf]
          %v598 = vlaneseq
          %v599 = vshrl.u32 %v598, 7
          %v600 = vsub.s32 0, %v599
          %v601 = vrot.slane %v399, %v600
          %v619 = vunpack.c.l.b16 %v581
          %v620 = vunpack.c.l.b16 %v582
          %v621 = vunpack.c.l.b16 %v583
          %v622 = vunpack.c.l.b16 %v584
          %v623 = vunpack.c.l.b16 %v585
          %v624 = vunpack.c.l.b16 %v586
          %v625 = vunpack.c.l.b16 %v587
          %v626 = vunpack.c.l.b16 %v588
          %v627 = vunpack.c.l.b16 %v589
          %v628 = vunpack.c.l.b16 %v590
          %v629 = vunpack.c.l.b16 %v591
          %v630 = vunpack.c.l.b16 %v592
          %v631 = vunpack.c.l.b16 %v593
          %v632 = vunpack.c.l.b16 %v594
          %v633 = vunpack.c.l.b16 %v595
          %v634 = vunpack.c.l.b16 %v596
          %v635 = vpack.c.b16 %v620, %v619
          %v636 = vpack.c.b16 %v622, %v621
          %v637 = vpack.c.b16 %v624, %v623
          %v638 = vpack.c.b16 %v626, %v625
          %v639 = vpack.c.b16 %v628, %v627
          %v640 = vpack.c.b16 %v630, %v629
          %v641 = vpack.c.b16 %v632, %v631
          %v642 = vpack.c.b16 %v634, %v633
          %651 = vmatprep.subr.bf16.mxu0 0
          %652 = vmatpush1.bf16.msra.mxu0 %v635
          %653 = vmatprep.subr.bf16.mxu0 0
          %654 = vmatpush1.bf16.msra.mxu0 %v636
          %655 = vmatprep.subr.bf16.mxu0 0
          %656 = vmatpush1.bf16.msra.mxu0 %v637
          %657 = vmatprep.subr.bf16.mxu0 0
          %658 = vmatpush1.bf16.msra.mxu0 %v638
          %659 = vmatprep.subr.bf16.mxu0 0
          %660 = vmatpush1.bf16.msra.mxu0 %v639
          %661 = vmatprep.subr.bf16.mxu0 0
          %662 = vmatpush1.bf16.msra.mxu0 %v640
          %663 = vmatprep.subr.bf16.mxu0 0
          %664 = vmatpush1.bf16.msra.mxu0 %v641
          %665 = vmatprep.subr.bf16.mxu0 0
          %666 = vmatpush1.bf16.msra.mxu0 %v642
          %667 = vmatprep.subr.bf16.mxu0 0
          %668 = vmatpush1.bf16.msra.mxu0 0
          %669 = vmatprep.subr.bf16.mxu0 0
          %670 = vmatpush1.bf16.msra.mxu0 0
          %671 = vmatprep.subr.bf16.mxu0 0
          %672 = vmatpush1.bf16.msra.mxu0 0
          %673 = vmatprep.subr.bf16.mxu0 0
          %674 = vmatpush1.bf16.msra.mxu0 0
          %675 = vmatprep.subr.bf16.mxu0 0
          %676 = vmatpush1.bf16.msra.mxu0 0
          %677 = vmatprep.subr.bf16.mxu0 0
          %678 = vmatpush1.bf16.msra.mxu0 0
          %679 = vmatprep.subr.bf16.mxu0 0
          %680 = vmatpush1.bf16.msra.mxu0 0
          %681 = vmatprep.subr.bf16.mxu0 0
          %682 = vmatpush1.bf16.msra.mxu0 0
          %683 = vmatprep.mubr.bf16.mxu0 0
          %684 = vmatmul.mubr.bf16.gmra.mrb[0].mxu0 %v580
          %v685 = vpop.f32.mrb[0].mxu0
          %v686 = vadd.f32 %v601, %v685
          %v687 = vpop.f32.mrb[0].mxu0
          %v688 = vpop.f32.mrb[0].mxu0
          %v689 = vpop.f32.mrb[0].mxu0
          %690 = vdwg.mxu0
          %v691 = vld [vmem:[%s358] sm:$0xff]
          %v692 = vlaneseq
          %v693 = vand.u32 %v692, 127
          %v694 = vstv %s35
          %vm695 = vcmp.eq.s32.totalorder %v693, %v694
          %v696 = vsel %vm695, %v691, 0.0
          %vm697 = vcmask 31744
          %v698 = vsel %vm697, %v696, 0.0
          %699 = vadd.xlane.f32.xlu0 %v698
          %v700 = vpop.xlane.xlu0 %699
          %v701 = vld [vmem:[#allocation5] sm:$0xff]
          %v702 = vmul.f32 %v700, %v686
          %v703 = vadd.f32 %v701, %v702
          %704 = vst [vmem:[#allocation5] sm:$0xff] %v703
        $region52: #{optimized_moe_forward.1} parent=43 // pred_fallthru
          _
        // Predicated region
        $region53: #{optimized_moe_forward.1} parent=43 // pred_check
          %p705 = pneg %p224
        $region54: #{optimized_moe_forward.1} parent=43 // pred_check_branch
          %707 = sbr.rel (%p705) target = $region56
        $region55: #{optimized_moe_forward.1} parent=43 // pred_region
          %s709 = ssub.s32 128, 128
          %710 = vsyncadd [#allocation6], %s709
          %s711 = smul.addr %s34, 128
          %s712 = scalar_lea.hbm %s8, %s711
          %s714 = sshll.u32 [#allocation5], 4
          %s715 = int_to_ptr.vmem [resolvable:$true] %s714
          %717 = dma.vmem_to_hbm [thread:$0]  %s715, 128, %s712, [#allocation6]
        $region56: #{optimized_moe_forward.1} parent=43 // pred_fallthru
          _
        // Predicated region
        $region57: #{optimized_moe_forward.1} parent=43 // pred_check
          %p718 = pneg %p224
        $region58: #{optimized_moe_forward.1} parent=43 // pred_check_branch
          %720 = sbr.rel (%p718) target = $region60
        $region59: #{optimized_moe_forward.1} parent=43 // pred_region
          %721 = dma.done [#allocation6], 128
        $region60: #{optimized_moe_forward.1} parent=43 // pred_fallthru
          _
      $region44: #{optimized_moe_forward.1} parent=5 // pred_fallthru
        _
      %p722 = scmp.le.s32.totalorder 2, %s25
      // Predicated region
      $region61: #{optimized_moe_forward.1} parent=5 // pred_check
        %p723 = pneg %p722
      $region62: #{optimized_moe_forward.1} parent=5 // pred_check_branch
        %725 = sbr.rel (%p723) target = $region64
      $region63: #{optimized_moe_forward.1} parent=5 // pred_region
        %s726 = ssub.s32 %s25, 2
      $region64: #{optimized_moe_forward.1} parent=5 // pred_fallthru
        _
    $region6: #{optimized_moe_forward.1} parent=1 // loop_footer
      %s29 = sadd.s32 1, %s25
    $region7: #{optimized_moe_forward.1} parent=1 // loop_footer_branch
      %24 = sbr.rel target = $region3
    $region8: #{optimized_moe_forward.1} parent=1 // loop_exit
      _
    %727 = vsyncpa [#allocation6], 1
    %s728 = scalar_lea.sflag [#allocation6], 1
    %729 = vsyncpa %s728, 1

</llo_original>
